<compile_context>
chip_gen: v7x
topology: tpu7x:2x2x1
jax: 0.10.0
libtpu: 0.0.40
codegen_flags: <defaults>
</compile_context>

<pallas_src>
import jax
import jax.numpy as jnp
from jax.experimental import pallas as pl
from jax.experimental.pallas import tpu as pltpu


def _normalize_kernel(x_ref, scale_ref, bias_ref, o_ref):
    # One lane-dense (rows, cols) tile; scale/bias are (rows, 1) and broadcast
    # across the 128-lane axis on the VPU (fused mul + add, no divides).
    x = x_ref[...].astype(scale_ref.dtype)
    o_ref[...] = (x * scale_ref[...] + bias_ref[...]).astype(o_ref.dtype)


def _round_up(x, m):
    return (x + m - 1) // m * m


def _compute_dtype(x_dtype):
    """bf16 math on bf16-native VPUs (v6e/v7x); f32 everywhere else."""
    try:
        if jnp.dtype(x_dtype) == jnp.bfloat16:
            kind = jax.devices()[0].device_kind.lower()
            if ("v5 lite" not in kind) and ("v5e" not in kind) and ("v5lite" not in kind):
                return jnp.bfloat16
    except Exception:
        pass
    return jnp.float32


def _pick_blocks(nc, hw, itemsize, target_bytes=4 << 20):
    """Choose a (rows, cols) block: lane-dense last dim, ~target_bytes total.

    Works for arbitrary (unaligned) nc/hw: Pallas pads ragged edge blocks, so
    we always keep rows a multiple of the dtype sublane count and cols a
    multiple of 128 instead of falling back to whole-array blocks.
    """
    # Dtype-aware sublane multiple: f32 -> 8, bf16 -> 16, int8/fp8 -> 32.
    sub = {4: 8, 2: 16, 1: 32}.get(itemsize, 8)

    # Lane (last) dim: multiple of 128, capped so rows stays large.
    cols = min(_round_up(hw, 128), 4096)

    # Sublane dim: multiple of `sub`, sized so one block is ~target_bytes.
    rows = max(sub, (target_bytes // (cols * itemsize)) // sub * sub)
    rows = min(rows, _round_up(nc, sub))

    # Ensure >= 2 blocks on the parallel row axis when the shape allows it,
    # so v7x's two TensorCores both stream (megacore sharding).
    if pl.cdiv(nc, rows) < 2 and rows > sub and nc > sub:
        rows = max(sub, (rows // 2) // sub * sub)

    return rows, cols


def normalize_layer(x, means, stds):
    """Pallas equivalent of NormalizeLayer.forward: (x - means[c]) / stds[c]."""
    N, C, H, W = x.shape
    assert means.shape == (C,) and stds.shape == (C,)

    NC, HW = N * C, H * W
    x2 = x.reshape(NC, HW)  # lane-dense 2-D view; row r corresponds to channel r % C

    # Fold mean/std into per-row scale/bias (computed once, in f32).
    cdt = _compute_dtype(x.dtype)
    means_f = means.astype(jnp.float32)
    stds_f = stds.astype(jnp.float32)
    scale = jnp.tile(1.0 / stds_f, N).reshape(NC, 1).astype(cdt)
    bias = jnp.tile(-means_f / stds_f, N).reshape(NC, 1).astype(cdt)

    rows, cols = _pick_blocks(NC, HW, x.dtype.itemsize)
    # j (cols) is the innermost grid axis -> the (i, 0) scale/bias blocks stay
    # resident across the inner loop and are not re-DMA'd each step.
    grid = (pl.cdiv(NC, rows), pl.cdiv(HW, cols))

    # Explicit VMEM budget: 2x(in) + 2x(out) double buffers + double-buffered
    # (rows, 1) scale/bias (padded to 128 lanes) + 4 MiB headroom.  This lets
    # the 4 MiB blocks compile on v5e's 16 MiB scoped default and stays far
    # below v7x's 64 MiB physical VMEM.
    block_bytes = rows * cols * x.dtype.itemsize
    sb_block_bytes = rows * 128 * jnp.dtype(cdt).itemsize
    vmem_limit = int(4 * block_bytes + 4 * sb_block_bytes + (4 << 20))

    out2 = pl.pallas_call(
        _normalize_kernel,
        out_shape=jax.ShapeDtypeStruct((NC, HW), x.dtype),
        grid=grid,
        in_specs=[
            pl.BlockSpec((rows, cols), lambda i, j: (i, j)),  # x tile
            pl.BlockSpec((rows, 1), lambda i, j: (i, 0)),     # per-row scale
            pl.BlockSpec((rows, 1), lambda i, j: (i, 0)),     # per-row bias
        ],
        out_specs=pl.BlockSpec((rows, cols), lambda i, j: (i, j)),
        compiler_params=pltpu.CompilerParams(
            dimension_semantics=("parallel", "parallel"),
            vmem_limit_bytes=vmem_limit),
    )(x2, scale, bias)

    return out2.reshape(N, C, H, W)


if __name__ == "__main__":
    key = jax.random.PRNGKey(0)
    N, C, H, W = 2, 4, 16, 16

    # Deterministic "dataset" channel means / stds (synthetic, as in __init__).
    means = jnp.array([0.485, 0.456, 0.406, 0.5], dtype=jnp.float32)
    stds = jnp.array([0.229, 0.224, 0.225, 0.25], dtype=jnp.float32)

    x = jax.random.normal(key, (N, C, H, W), dtype=jnp.float32)

    out = jax.block_until_ready(normalize_layer(x, means, stds))

    # Reference check (plain JAX, same semantics as the PyTorch forward intent).
    ref = (x - means.reshape(1, C, 1, 1)) / stds.reshape(1, C, 1, 1)
    assert out.shape == x.shape and out.dtype == x.dtype
    assert jnp.allclose(out, ref, atol=1e-5, rtol=1e-5)

    print("KERNEL_OK")
</pallas_src>

<mosaic_0001>
module attributes {stable_mosaic.version = 11 : i64} {
  func.func @_normalize_kernel(%arg0: i32, %arg1: i32, %arg2: memref<8x256xf32, #tpu.memory_space<vmem>>, %arg3: memref<8x1xf32, #tpu.memory_space<vmem>>, %arg4: memref<8x1xf32, #tpu.memory_space<vmem>>, %arg5: memref<8x256xf32, #tpu.memory_space<vmem>>) attributes {dimension_semantics = [#tpu.dimension_semantics<parallel>, #tpu.dimension_semantics<parallel>], iteration_bounds = array<i64: 1, 1>, scalar_prefetch = 0 : i64, scratch_operands = 0 : i64, tpu.core_type = #tpu.core_type<tc>, window_params = [{transform_indices = @transform_0, window_bounds = array<i64: 8, 256>}, {transform_indices = @transform_1, window_bounds = array<i64: 8, 1>}, {transform_indices = @transform_2, window_bounds = array<i64: 8, 1>}, {transform_indices = @transform_3, window_bounds = array<i64: 8, 256>}]} {
    %c0 = arith.constant 0 : index
    %c0_0 = arith.constant 0 : index
    %0 = vector.load %arg2[%c0, %c0_0] : memref<8x256xf32, #tpu.memory_space<vmem>>, vector<8x256xf32>
    %c0_1 = arith.constant 0 : index
    %c0_2 = arith.constant 0 : index
    %1 = vector.load %arg3[%c0_1, %c0_2] : memref<8x1xf32, #tpu.memory_space<vmem>>, vector<8x1xf32>
    %2 = vector.broadcast %1 : vector<8x1xf32> to vector<8x256xf32>
    %3 = arith.mulf %0, %2 : vector<8x256xf32>
    %c0_3 = arith.constant 0 : index
    %c0_4 = arith.constant 0 : index
    %4 = vector.load %arg4[%c0_3, %c0_4] : memref<8x1xf32, #tpu.memory_space<vmem>>, vector<8x1xf32>
    %5 = vector.broadcast %4 : vector<8x1xf32> to vector<8x256xf32>
    %6 = arith.addf %3, %5 : vector<8x256xf32>
    %c0_5 = arith.constant 0 : index
    %c0_6 = arith.constant 0 : index
    %7 = vector.load %arg5[%c0_5, %c0_6] : memref<8x256xf32, #tpu.memory_space<vmem>>, vector<8x256xf32>
    tpu.vector_store %arg5[%c0_5, %c0_6], %6 {strides = array<i32>} : memref<8x256xf32, #tpu.memory_space<vmem>>, vector<8x256xf32>,
    return
  }
  func.func @transform_0(%arg0: i32, %arg1: i32) -> (i32, i32) {
    %c0_i32 = arith.constant 0 : i32
    return %arg0, %arg1 : i32, i32
  }
  func.func @transform_1(%arg0: i32, %arg1: i32) -> (i32, i32) {
    %c0_i32 = arith.constant 0 : i32
    %c0_i32_0 = arith.constant 0 : i32
    return %arg0, %c0_i32 : i32, i32
  }
  func.func @transform_2(%arg0: i32, %arg1: i32) -> (i32, i32) {
    %c0_i32 = arith.constant 0 : i32
    %c0_i32_0 = arith.constant 0 : i32
    return %arg0, %c0_i32 : i32, i32
  }
  func.func @transform_3(%arg0: i32, %arg1: i32) -> (i32, i32) {
    %c0_i32 = arith.constant 0 : i32
    return %arg0, %arg1 : i32, i32
  }
}

</mosaic_0001>

<llo_original>
// kernel: tpu_custom_call.1
$region0: #{tpu_custom_call.1}
  #allocation0 [shape = 'u32[]', space=smem, size = 0x4, offset = 0x4, fixed_abs, tag = 'smem constant byte address 0x4 - core index']
  #allocation1 [shape = 'u32[144,128]{1,0:T(1,128)}', space=vmem, size = 0x12000, scoped, tag = 'internal scratch']
  %s0 = inlined_call_operand.vmem [shape: f32[8,256], index: 0, kind: input, shape index: {}]
  %s1 = inlined_call_operand.vmem [shape: f32[8,1], index: 1, kind: input, shape index: {}]
  %s2 = inlined_call_operand.vmem [shape: f32[8,1], index: 2, kind: input, shape index: {}]
  %s3 = inlined_call_operand.hbm [shape: f32[8,256], index: 3, kind: output, shape index: {}]
  %s4 = sld [smem:[#allocation0]]
  $region22: #{tpu_custom_call.1} parent=0
    _
  %s6 = ssub.s32 1, %s4
  %s7 = scalar_select 0, %s6, %s4
  $region1: #{tpu_custom_call.1} parent=0
    #allocation2 [shape = 'u8[8192]{0}', space=vmem, size = 0x2000, scoped, tag = 'output window, operand 0, single buffered']
    #allocation3 [shape = 's32[1]{0}', space=sflag, size = 0x4, scoped, tag = 'scoped memory for tpu_custom_call.1']
    %8 = vsyncpa [#allocation3], 0
    // Predicated region
    $region2: #{tpu_custom_call.1} parent=1 // pred_check
      _
    $region3: #{tpu_custom_call.1} parent=1 // pred_check_branch
      %10 = sbr.rel (0) target = $region5
    $region4: #{tpu_custom_call.1} parent=1 // pred_region
      _
    $region5: #{tpu_custom_call.1} parent=1 // pred_fallthru
      _
    // Predicated region
    $region6: #{tpu_custom_call.1} parent=1 // pred_check
      _
    $region7: #{tpu_custom_call.1} parent=1 // pred_check_branch
      %12 = sbr.rel (0) target = $region9
    $region8: #{tpu_custom_call.1} parent=1 // pred_region
      _
    $region9: #{tpu_custom_call.1} parent=1 // pred_fallthru
      _
    // Predicated region
    $region10: #{tpu_custom_call.1} parent=1 // pred_check
      _
    $region11: #{tpu_custom_call.1} parent=1 // pred_check_branch
      %14 = sbr.rel (0) target = $region13
    $region12: #{tpu_custom_call.1} parent=1 // pred_region
      _
    $region13: #{tpu_custom_call.1} parent=1 // pred_fallthru
      _
    %v15 = vld [vmem:[%s0] sm:$0xff]
    %v16 = vld [vmem:[%s0 + $0x8] sm:$0xff]
    %v17 = vld [vmem:[%s1] sm:$0xff]
    %19 = vset.pattern.permute.xlu0 0
    %20 = vperm.xlu0 %19, %v17
    %v21 = vpop.permute.xlu0 %20
    %v23 = vmul.f32 %v15, %v21
    %v24 = vmul.f32 %v16, %v21
    %v25 = vld [vmem:[%s2] sm:$0xff]
    %27 = vset.pattern.permute.xlu0 0
    %28 = vperm.xlu0 %27, %v25
    %v29 = vpop.permute.xlu0 %28
    %v31 = vadd.f32 %v23, %v29
    %v32 = vadd.f32 %v24, %v29
    %33 = vst [vmem:[#allocation2] sm:$0xff] %v31
    %34 = vst [vmem:[#allocation2 + $0x8] sm:$0xff] %v32
    // Predicated region
    $region14: #{tpu_custom_call.1} parent=1 // pred_check
      _
    $region15: #{tpu_custom_call.1} parent=1 // pred_check_branch
      %36 = sbr.rel (0) target = $region17
    $region16: #{tpu_custom_call.1} parent=1 // pred_region
      %s38 = ssub.s32 256, 256
      %39 = vsyncadd [#allocation3], %s38
      %s41 = sshll.u32 [#allocation2], 4
      %s42 = int_to_ptr.vmem [resolvable:$true] %s41
      %44 = dma.vmem_to_hbm [thread:$0]  %s42, 256, %s3, [#allocation3]
    $region17: #{tpu_custom_call.1} parent=1 // pred_fallthru
      _
    // Predicated region
    $region18: #{tpu_custom_call.1} parent=1 // pred_check
      _
    $region19: #{tpu_custom_call.1} parent=1 // pred_check_branch
      %46 = sbr.rel (0) target = $region21
    $region20: #{tpu_custom_call.1} parent=1 // pred_region
      %47 = dma.done [#allocation3], 256
    $region21: #{tpu_custom_call.1} parent=1 // pred_fallthru
      _
    %48 = vsyncpa [#allocation3], 1

</llo_original>
